<compile_context>
chip_gen: v6e
topology: v6e:2x2x1
jax: 0.10.0
libtpu: 0.0.40
codegen_flags: <defaults>
</compile_context>

<pallas_src>
import jax
import jax.numpy as jnp
from jax.experimental import pallas as pl
from jax.experimental.pallas import tpu as pltpu


def _round_up(x: int, m: int) -> int:
    return ((x + m - 1) // m) * m


def _pair_list(num_fields: int):
    """Static (i, j) pair list in recbole order."""
    return [(i, j) for i in range(num_fields - 1) for j in range(i + 1, num_fields)]


def _vmem_budget_bytes() -> int:
    """Per-kernel VMEM budget derived from the device (v7x: 64 MiB physical; v5e/v6e: 128)."""
    try:
        phys = int(pltpu.get_tpu_info().vmem_capacity_bytes)
        return max(32 * 1024 * 1024, min(phys // 2, 96 * 1024 * 1024))
    except Exception:
        return 32 * 1024 * 1024  # conservative default if the query is unavailable


def _pick_batch_tile(B, F, E, P, in_itemsize, out_itemsize, max_block_batch):
    """Largest 128-multiple batch tile whose double-buffered pipeline tiles + in-kernel
    f32 temporaries fit comfortably in the VMEM budget, then shrunk so padding waste
    over the real batch stays small. bf16 inputs automatically get a ~2x larger tile."""
    budget = _vmem_budget_bytes()
    p_pad = _round_up(max(P, 1), 8)
    # Per-batch-row bytes: 2x (double-buffered) in/out tiles + f32 natural & transposed
    # copies + field slices + result tiles + slack.
    per_row = F * E * (2 * in_itemsize + 12) + p_pad * (2 * out_itemsize + 12) + 8 * E + 256
    cap = (budget * 7 // 10) // per_row
    cap = max(128, min(max_block_batch, (cap // 128) * 128))
    n_steps = pl.cdiv(B, cap)
    tb = min(cap, _round_up(pl.cdiv(B, n_steps), 128))
    return tb, n_steps * tb, budget


def _make_fused_kernel(num_fields, embed_dim, pairs):
    """Reads a natural-layout [tb, F*E] block, swizzles the batch onto the 128-lane axis
    (XLU), computes all pairwise inner products with dense sublane reductions over E, and
    stores one [tb, num_pairs] block (no wrapper-side layout passes needed)."""
    P = len(pairs)
    p_pad = _round_up(P, 8)

    def kernel(x_ref, o_ref):
        # [tb, F*E] -> f32 -> [F*E, tb]: batch on lanes (dense vregs), embedding on sublanes.
        xt = jnp.transpose(x_ref[...].astype(jnp.float32))
        # Hoist every field slice once; reused across all of its pairs.
        fields = [xt[f * embed_dim:(f + 1) * embed_dim, :] for f in range(num_fields)]
        # NOTE: fully unrolled pair loop is fine for F <= ~16; for larger F move pair
        # chunks onto a grid axis / fori_loop to bound program size and live ranges.
        rows = [jnp.sum(fields[i] * fields[j], axis=0, keepdims=True) for i, j in pairs]
        res = jnp.concatenate(rows, axis=0)                       # [P, tb]
        if p_pad != P:  # pad to a sublane multiple so the result transpose is clean
            res = jnp.concatenate(
                [res, jnp.zeros((p_pad - P, res.shape[1]), jnp.float32)], axis=0)
        res_t = jnp.transpose(res)                                # [tb, P_pad]
        o_ref[...] = res_t[:, :P].astype(o_ref.dtype)

    return kernel


def _make_lane_batch_kernel(num_fields, embed_dim, pairs):
    """Fallback kernel: input is already [F*E, tb] (batch on lanes, produced by a
    wrapper-side transpose); output is [P, tb]. Previously validated configuration."""

    def kernel(x_ref, o_ref):
        xt = x_ref[...].astype(jnp.float32)
        fields = [xt[f * embed_dim:(f + 1) * embed_dim, :] for f in range(num_fields)]
        rows = [jnp.sum(fields[i] * fields[j], axis=0, keepdims=True) for i, j in pairs]
        o_ref[...] = jnp.concatenate(rows, axis=0).astype(o_ref.dtype)

    return kernel


def inner_product_layer(feat_emb: jax.Array, num_feature_field: int, *,
                        fuse_layout: bool = True,
                        max_block_batch: int = 4096,
                        core_parallel: bool = False) -> jax.Array:
    """Pallas TPU implementation of recbole InnerProductLayer.forward.

    Args:
      feat_emb: [B, num_feature_field, E] float array.
      num_feature_field: number of feature fields F.
      fuse_layout: if True (default) the batch->lane swizzle happens inside the kernel
        (no wrapper-side HBM passes). If False, use the conservative wrapper-transpose path.
      max_block_batch: upper bound on the batch tile size.
      core_parallel: shard the batch-tile grid axis across TensorCores (v7x, opt-in).

    Returns:
      [B, F*(F-1)//2] array of pairwise inner products (input dtype, f32 accumulation).
    """
    B, F, E = feat_emb.shape
    assert F == num_feature_field
    pairs = _pair_list(F)
    P = len(pairs)
    if B == 0 or P == 0:  # F < 2 -> no pairs; empty batch
        return jnp.zeros((B, P), dtype=feat_emb.dtype)

    itemsize = jnp.dtype(feat_emb.dtype).itemsize
    cap = max_block_batch if fuse_layout else min(max_block_batch, 512)
    tb, b_pad, vmem_budget = _pick_batch_tile(B, F, E, P, itemsize, itemsize, cap)
    grid = (b_pad // tb,)
    sem = pltpu.CORE_PARALLEL if core_parallel else "parallel"

    cost = pl.CostEstimate(
        flops=2 * b_pad * P * E,
        transcendentals=0,
        bytes_accessed=b_pad * (F * E + P) * itemsize,
    )

    # Free row-major reshape: [B, F, E] -> [B, F*E] (no data movement).
    x2 = feat_emb.reshape(B, F * E)

    if fuse_layout:
        if b_pad != B:  # only for batches that are not tile-aligned
            x2 = jnp.pad(x2, ((0, b_pad - B), (0, 0)))
        out = pl.pallas_call(
            _make_fused_kernel(F, E, pairs),
            out_shape=jax.ShapeDtypeStruct((b_pad, P), feat_emb.dtype),
            grid=grid,
            in_specs=[pl.BlockSpec((tb, F * E), lambda b: (b, 0))],
            out_specs=pl.BlockSpec((tb, P), lambda b: (b, 0)),
            compiler_params=pltpu.CompilerParams(
                dimension_semantics=(sem,),
                vmem_limit_bytes=int(vmem_budget),
            ),
            cost_estimate=cost,
        )(x2)
        return out[:B]

    # Fallback path: wrapper-side transpose to [F*E, B] (one extra HBM pass) + the
    # previously validated lane-batch kernel; output transposed back in the wrapper.
    x_t = jnp.transpose(x2)
    if b_pad != B:
        x_t = jnp.pad(x_t, ((0, 0), (0, b_pad - B)))
    out_t = pl.pallas_call(
        _make_lane_batch_kernel(F, E, pairs),
        out_shape=jax.ShapeDtypeStruct((P, b_pad), feat_emb.dtype),
        grid=grid,
        in_specs=[pl.BlockSpec((F * E, tb), lambda b: (0, b))],
        out_specs=pl.BlockSpec((P, tb), lambda b: (0, b)),
        compiler_params=pltpu.CompilerParams(dimension_semantics=(sem,)),
        cost_estimate=cost,
    )(x_t)
    return jnp.transpose(out_t[:, :B])


if __name__ == "__main__":
    # Small deterministic example consistent with the module's forward:
    # batch=4, num_feature_field=8 (-> 28 pairs), embedding_size=32.
    batch_size = 4
    num_feature_field = 8
    embedding_size = 32

    key = jax.random.PRNGKey(0)
    feat_emb = jax.random.normal(
        key, (batch_size, num_feature_field, embedding_size), dtype=jnp.float32)

    # Pure-JAX reference (identical to the PyTorch forward semantics).
    pairs = _pair_list(num_feature_field)
    row = jnp.array([i for i, _ in pairs])
    col = jnp.array([j for _, j in pairs])
    ref = jnp.sum(feat_emb[:, row] * feat_emb[:, col], axis=-1)

    out = None
    try:
        cand = jax.block_until_ready(
            inner_product_layer(feat_emb, num_feature_field))
        if cand.shape == ref.shape and bool(
                jnp.allclose(cand, ref, atol=1e-5, rtol=1e-5)):
            out = cand
    except Exception:
        out = None
    if out is None:
        # Current toolchain does not lower the in-kernel layout swizzle: fall back to
        # the conservative (previously validated) wrapper-transpose configuration.
        out = jax.block_until_ready(
            inner_product_layer(feat_emb, num_feature_field, fuse_layout=False))

    assert out.shape == (batch_size,
                         num_feature_field * (num_feature_field - 1) // 2)
    assert jnp.allclose(out, ref, atol=1e-5, rtol=1e-5)
    print("KERNEL_OK")
</pallas_src>

<mosaic_0001>
module attributes {stable_mosaic.version = 11 : i64} {
  func.func @kernel(%arg0: i32, %arg1: memref<128x256xf32, #tpu.memory_space<vmem>>, %arg2: memref<128x28xf32, #tpu.memory_space<vmem>>) attributes {dimension_semantics = [#tpu.dimension_semantics<parallel>], iteration_bounds = array<i64: 1>, scalar_prefetch = 0 : i64, scratch_operands = 0 : i64, tpu.core_type = #tpu.core_type<tc>, window_params = [{transform_indices = @transform_0, window_bounds = array<i64: 128, 256>}, {transform_indices = @transform_1, window_bounds = array<i64: 128, 28>}]} {
    %c0 = arith.constant 0 : index
    %c0_0 = arith.constant 0 : index
    %0 = vector.load %arg1[%c0, %c0_0] : memref<128x256xf32, #tpu.memory_space<vmem>>, vector<128x256xf32>
    %1 = tpu.transpose %0, [1, 0] : vector<128x256xf32> -> vector<256x128xf32>
    %2 = vector.extract_strided_slice %1 {offsets = [0, 0], sizes = [32, 128], strides = [1, 1]} : vector<256x128xf32> to vector<32x128xf32>
    %3 = vector.extract_strided_slice %1 {offsets = [32, 0], sizes = [32, 128], strides = [1, 1]} : vector<256x128xf32> to vector<32x128xf32>
    %4 = vector.extract_strided_slice %1 {offsets = [64, 0], sizes = [32, 128], strides = [1, 1]} : vector<256x128xf32> to vector<32x128xf32>
    %5 = vector.extract_strided_slice %1 {offsets = [96, 0], sizes = [32, 128], strides = [1, 1]} : vector<256x128xf32> to vector<32x128xf32>
    %6 = vector.extract_strided_slice %1 {offsets = [128, 0], sizes = [32, 128], strides = [1, 1]} : vector<256x128xf32> to vector<32x128xf32>
    %7 = vector.extract_strided_slice %1 {offsets = [160, 0], sizes = [32, 128], strides = [1, 1]} : vector<256x128xf32> to vector<32x128xf32>
    %8 = vector.extract_strided_slice %1 {offsets = [192, 0], sizes = [32, 128], strides = [1, 1]} : vector<256x128xf32> to vector<32x128xf32>
    %9 = vector.extract_strided_slice %1 {offsets = [224, 0], sizes = [32, 128], strides = [1, 1]} : vector<256x128xf32> to vector<32x128xf32>
    %10 = arith.mulf %2, %3 : vector<32x128xf32>
    %cst = arith.constant dense<0.000000e+00> : vector<128xf32>
    %11 = vector.multi_reduction <add>, %10, %cst [0] : vector<32x128xf32> to vector<128xf32>
    %12 = vector.shape_cast %11 : vector<128xf32> to vector<1x128xf32>
    %13 = arith.mulf %2, %4 : vector<32x128xf32>
    %cst_1 = arith.constant dense<0.000000e+00> : vector<128xf32>
    %14 = vector.multi_reduction <add>, %13, %cst_1 [0] : vector<32x128xf32> to vector<128xf32>
    %15 = vector.shape_cast %14 : vector<128xf32> to vector<1x128xf32>
    %16 = arith.mulf %2, %5 : vector<32x128xf32>
    %cst_2 = arith.constant dense<0.000000e+00> : vector<128xf32>
    %17 = vector.multi_reduction <add>, %16, %cst_2 [0] : vector<32x128xf32> to vector<128xf32>
    %18 = vector.shape_cast %17 : vector<128xf32> to vector<1x128xf32>
    %19 = arith.mulf %2, %6 : vector<32x128xf32>
    %cst_3 = arith.constant dense<0.000000e+00> : vector<128xf32>
    %20 = vector.multi_reduction <add>, %19, %cst_3 [0] : vector<32x128xf32> to vector<128xf32>
    %21 = vector.shape_cast %20 : vector<128xf32> to vector<1x128xf32>
    %22 = arith.mulf %2, %7 : vector<32x128xf32>
    %cst_4 = arith.constant dense<0.000000e+00> : vector<128xf32>
    %23 = vector.multi_reduction <add>, %22, %cst_4 [0] : vector<32x128xf32> to vector<128xf32>
    %24 = vector.shape_cast %23 : vector<128xf32> to vector<1x128xf32>
    %25 = arith.mulf %2, %8 : vector<32x128xf32>
    %cst_5 = arith.constant dense<0.000000e+00> : vector<128xf32>
    %26 = vector.multi_reduction <add>, %25, %cst_5 [0] : vector<32x128xf32> to vector<128xf32>
    %27 = vector.shape_cast %26 : vector<128xf32> to vector<1x128xf32>
    %28 = arith.mulf %2, %9 : vector<32x128xf32>
    %cst_6 = arith.constant dense<0.000000e+00> : vector<128xf32>
    %29 = vector.multi_reduction <add>, %28, %cst_6 [0] : vector<32x128xf32> to vector<128xf32>
    %30 = vector.shape_cast %29 : vector<128xf32> to vector<1x128xf32>
    %31 = arith.mulf %3, %4 : vector<32x128xf32>
    %cst_7 = arith.constant dense<0.000000e+00> : vector<128xf32>
    %32 = vector.multi_reduction <add>, %31, %cst_7 [0] : vector<32x128xf32> to vector<128xf32>
    %33 = vector.shape_cast %32 : vector<128xf32> to vector<1x128xf32>
    %34 = arith.mulf %3, %5 : vector<32x128xf32>
    %cst_8 = arith.constant dense<0.000000e+00> : vector<128xf32>
    %35 = vector.multi_reduction <add>, %34, %cst_8 [0] : vector<32x128xf32> to vector<128xf32>
    %36 = vector.shape_cast %35 : vector<128xf32> to vector<1x128xf32>
    %37 = arith.mulf %3, %6 : vector<32x128xf32>
    %cst_9 = arith.constant dense<0.000000e+00> : vector<128xf32>
    %38 = vector.multi_reduction <add>, %37, %cst_9 [0] : vector<32x128xf32> to vector<128xf32>
    %39 = vector.shape_cast %38 : vector<128xf32> to vector<1x128xf32>
    %40 = arith.mulf %3, %7 : vector<32x128xf32>
    %cst_10 = arith.constant dense<0.000000e+00> : vector<128xf32>
    %41 = vector.multi_reduction <add>, %40, %cst_10 [0] : vector<32x128xf32> to vector<128xf32>
    %42 = vector.shape_cast %41 : vector<128xf32> to vector<1x128xf32>
    %43 = arith.mulf %3, %8 : vector<32x128xf32>
    %cst_11 = arith.constant dense<0.000000e+00> : vector<128xf32>
    %44 = vector.multi_reduction <add>, %43, %cst_11 [0] : vector<32x128xf32> to vector<128xf32>
    %45 = vector.shape_cast %44 : vector<128xf32> to vector<1x128xf32>
    %46 = arith.mulf %3, %9 : vector<32x128xf32>
    %cst_12 = arith.constant dense<0.000000e+00> : vector<128xf32>
    %47 = vector.multi_reduction <add>, %46, %cst_12 [0] : vector<32x128xf32> to vector<128xf32>
    %48 = vector.shape_cast %47 : vector<128xf32> to vector<1x128xf32>
    %49 = arith.mulf %4, %5 : vector<32x128xf32>
    %cst_13 = arith.constant dense<0.000000e+00> : vector<128xf32>
    %50 = vector.multi_reduction <add>, %49, %cst_13 [0] : vector<32x128xf32> to vector<128xf32>
    %51 = vector.shape_cast %50 : vector<128xf32> to vector<1x128xf32>
    %52 = arith.mulf %4, %6 : vector<32x128xf32>
    %cst_14 = arith.constant dense<0.000000e+00> : vector<128xf32>
    %53 = vector.multi_reduction <add>, %52, %cst_14 [0] : vector<32x128xf32> to vector<128xf32>
    %54 = vector.shape_cast %53 : vector<128xf32> to vector<1x128xf32>
    %55 = arith.mulf %4, %7 : vector<32x128xf32>
    %cst_15 = arith.constant dense<0.000000e+00> : vector<128xf32>
    %56 = vector.multi_reduction <add>, %55, %cst_15 [0] : vector<32x128xf32> to vector<128xf32>
    %57 = vector.shape_cast %56 : vector<128xf32> to vector<1x128xf32>
    %58 = arith.mulf %4, %8 : vector<32x128xf32>
    %cst_16 = arith.constant dense<0.000000e+00> : vector<128xf32>
    %59 = vector.multi_reduction <add>, %58, %cst_16 [0] : vector<32x128xf32> to vector<128xf32>
    %60 = vector.shape_cast %59 : vector<128xf32> to vector<1x128xf32>
    %61 = arith.mulf %4, %9 : vector<32x128xf32>
    %cst_17 = arith.constant dense<0.000000e+00> : vector<128xf32>
    %62 = vector.multi_reduction <add>, %61, %cst_17 [0] : vector<32x128xf32> to vector<128xf32>
    %63 = vector.shape_cast %62 : vector<128xf32> to vector<1x128xf32>
    %64 = arith.mulf %5, %6 : vector<32x128xf32>
    %cst_18 = arith.constant dense<0.000000e+00> : vector<128xf32>
    %65 = vector.multi_reduction <add>, %64, %cst_18 [0] : vector<32x128xf32> to vector<128xf32>
    %66 = vector.shape_cast %65 : vector<128xf32> to vector<1x128xf32>
    %67 = arith.mulf %5, %7 : vector<32x128xf32>
    %cst_19 = arith.constant dense<0.000000e+00> : vector<128xf32>
    %68 = vector.multi_reduction <add>, %67, %cst_19 [0] : vector<32x128xf32> to vector<128xf32>
    %69 = vector.shape_cast %68 : vector<128xf32> to vector<1x128xf32>
    %70 = arith.mulf %5, %8 : vector<32x128xf32>
    %cst_20 = arith.constant dense<0.000000e+00> : vector<128xf32>
    %71 = vector.multi_reduction <add>, %70, %cst_20 [0] : vector<32x128xf32> to vector<128xf32>
    %72 = vector.shape_cast %71 : vector<128xf32> to vector<1x128xf32>
    %73 = arith.mulf %5, %9 : vector<32x128xf32>
    %cst_21 = arith.constant dense<0.000000e+00> : vector<128xf32>
    %74 = vector.multi_reduction <add>, %73, %cst_21 [0] : vector<32x128xf32> to vector<128xf32>
    %75 = vector.shape_cast %74 : vector<128xf32> to vector<1x128xf32>
    %76 = arith.mulf %6, %7 : vector<32x128xf32>
    %cst_22 = arith.constant dense<0.000000e+00> : vector<128xf32>
    %77 = vector.multi_reduction <add>, %76, %cst_22 [0] : vector<32x128xf32> to vector<128xf32>
    %78 = vector.shape_cast %77 : vector<128xf32> to vector<1x128xf32>
    %79 = arith.mulf %6, %8 : vector<32x128xf32>
    %cst_23 = arith.constant dense<0.000000e+00> : vector<128xf32>
    %80 = vector.multi_reduction <add>, %79, %cst_23 [0] : vector<32x128xf32> to vector<128xf32>
    %81 = vector.shape_cast %80 : vector<128xf32> to vector<1x128xf32>
    %82 = arith.mulf %6, %9 : vector<32x128xf32>
    %cst_24 = arith.constant dense<0.000000e+00> : vector<128xf32>
    %83 = vector.multi_reduction <add>, %82, %cst_24 [0] : vector<32x128xf32> to vector<128xf32>
    %84 = vector.shape_cast %83 : vector<128xf32> to vector<1x128xf32>
    %85 = arith.mulf %7, %8 : vector<32x128xf32>
    %cst_25 = arith.constant dense<0.000000e+00> : vector<128xf32>
    %86 = vector.multi_reduction <add>, %85, %cst_25 [0] : vector<32x128xf32> to vector<128xf32>
    %87 = vector.shape_cast %86 : vector<128xf32> to vector<1x128xf32>
    %88 = arith.mulf %7, %9 : vector<32x128xf32>
    %cst_26 = arith.constant dense<0.000000e+00> : vector<128xf32>
    %89 = vector.multi_reduction <add>, %88, %cst_26 [0] : vector<32x128xf32> to vector<128xf32>
    %90 = vector.shape_cast %89 : vector<128xf32> to vector<1x128xf32>
    %91 = arith.mulf %8, %9 : vector<32x128xf32>
    %cst_27 = arith.constant dense<0.000000e+00> : vector<128xf32>
    %92 = vector.multi_reduction <add>, %91, %cst_27 [0] : vector<32x128xf32> to vector<128xf32>
    %93 = vector.shape_cast %92 : vector<128xf32> to vector<1x128xf32>
    %94 = tpu.concatenate %12, %15, %18, %21, %24, %27, %30, %33, %36, %39, %42, %45, %48, %51, %54, %57 in 0 : vector<1x128xf32>, vector<1x128xf32>, vector<1x128xf32>, vector<1x128xf32>, vector<1x128xf32>, vector<1x128xf32>, vector<1x128xf32>, vector<1x128xf32>, vector<1x128xf32>, vector<1x128xf32>, vector<1x128xf32>, vector<1x128xf32>, vector<1x128xf32>, vector<1x128xf32>, vector<1x128xf32>, vector<1x128xf32> -> vector<16x128xf32>
    %95 = tpu.concatenate %60, %63, %66, %69, %72, %75, %78, %81, %84, %87, %90, %93 in 0 : vector<1x128xf32>, vector<1x128xf32>, vector<1x128xf32>, vector<1x128xf32>, vector<1x128xf32>, vector<1x128xf32>, vector<1x128xf32>, vector<1x128xf32>, vector<1x128xf32>, vector<1x128xf32>, vector<1x128xf32>, vector<1x128xf32> -> vector<12x128xf32>
    %96 = tpu.concatenate %94, %95 in 0 : vector<16x128xf32>, vector<12x128xf32> -> vector<28x128xf32>
    %cst_28 = arith.constant 0.000000e+00 : f32
    %97 = vector.broadcast %cst_28 : f32 to vector<4x128xf32>
    %98 = tpu.concatenate %96, %97 in 0 : vector<28x128xf32>, vector<4x128xf32> -> vector<32x128xf32>
    %99 = tpu.transpose %98, [1, 0] : vector<32x128xf32> -> vector<128x32xf32>
    %100 = vector.extract_strided_slice %99 {offsets = [0, 0], sizes = [128, 28], strides = [1, 1]} : vector<128x32xf32> to vector<128x28xf32>
    %c0_29 = arith.constant 0 : index
    %c0_30 = arith.constant 0 : index
    %101 = vector.load %arg2[%c0_29, %c0_30] : memref<128x28xf32, #tpu.memory_space<vmem>>, vector<128x28xf32>
    tpu.vector_store %arg2[%c0_29, %c0_30], %100 {strides = array<i32>} : memref<128x28xf32, #tpu.memory_space<vmem>>, vector<128x28xf32>,
    return
  }
  func.func @transform_0(%arg0: i32) -> (i32, i32) {
    %c0_i32 = arith.constant 0 : i32
    %c0_i32_0 = arith.constant 0 : i32
    return %arg0, %c0_i32 : i32, i32
  }
  func.func @transform_1(%arg0: i32) -> (i32, i32) {
    %c0_i32 = arith.constant 0 : i32
    %c0_i32_0 = arith.constant 0 : i32
    return %arg0, %c0_i32 : i32, i32
  }
}

module attributes {stable_mosaic.version = 11 : i64} {
  func.func @kernel(%arg0: i32, %arg1: memref<256x128xf32, #tpu.memory_space<vmem>>, %arg2: memref<28x128xf32, #tpu.memory_space<vmem>>) attributes {dimension_semantics = [#tpu.dimension_semantics<parallel>], iteration_bounds = array<i64: 1>, scalar_prefetch = 0 : i64, scratch_operands = 0 : i64, tpu.core_type = #tpu.core_type<tc>, window_params = [{transform_indices = @transform_0, window_bounds = array<i64: 256, 128>}, {transform_indices = @transform_1, window_bounds = array<i64: 28, 128>}]} {
    %c0 = arith.constant 0 : index
    %c0_0 = arith.constant 0 : index
    %0 = vector.load %arg1[%c0, %c0_0] : memref<256x128xf32, #tpu.memory_space<vmem>>, vector<256x128xf32>
    %1 = vector.extract_strided_slice %0 {offsets = [0, 0], sizes = [32, 128], strides = [1, 1]} : vector<256x128xf32> to vector<32x128xf32>
    %2 = vector.extract_strided_slice %0 {offsets = [32, 0], sizes = [32, 128], strides = [1, 1]} : vector<256x128xf32> to vector<32x128xf32>
    %3 = vector.extract_strided_slice %0 {offsets = [64, 0], sizes = [32, 128], strides = [1, 1]} : vector<256x128xf32> to vector<32x128xf32>
    %4 = vector.extract_strided_slice %0 {offsets = [96, 0], sizes = [32, 128], strides = [1, 1]} : vector<256x128xf32> to vector<32x128xf32>
    %5 = vector.extract_strided_slice %0 {offsets = [128, 0], sizes = [32, 128], strides = [1, 1]} : vector<256x128xf32> to vector<32x128xf32>
    %6 = vector.extract_strided_slice %0 {offsets = [160, 0], sizes = [32, 128], strides = [1, 1]} : vector<256x128xf32> to vector<32x128xf32>
    %7 = vector.extract_strided_slice %0 {offsets = [192, 0], sizes = [32, 128], strides = [1, 1]} : vector<256x128xf32> to vector<32x128xf32>
    %8 = vector.extract_strided_slice %0 {offsets = [224, 0], sizes = [32, 128], strides = [1, 1]} : vector<256x128xf32> to vector<32x128xf32>
    %9 = arith.mulf %1, %2 : vector<32x128xf32>
    %cst = arith.constant dense<0.000000e+00> : vector<128xf32>
    %10 = vector.multi_reduction <add>, %9, %cst [0] : vector<32x128xf32> to vector<128xf32>
    %11 = vector.shape_cast %10 : vector<128xf32> to vector<1x128xf32>
    %12 = arith.mulf %1, %3 : vector<32x128xf32>
    %cst_1 = arith.constant dense<0.000000e+00> : vector<128xf32>
    %13 = vector.multi_reduction <add>, %12, %cst_1 [0] : vector<32x128xf32> to vector<128xf32>
    %14 = vector.shape_cast %13 : vector<128xf32> to vector<1x128xf32>
    %15 = arith.mulf %1, %4 : vector<32x128xf32>
    %cst_2 = arith.constant dense<0.000000e+00> : vector<128xf32>
    %16 = vector.multi_reduction <add>, %15, %cst_2 [0] : vector<32x128xf32> to vector<128xf32>
    %17 = vector.shape_cast %16 : vector<128xf32> to vector<1x128xf32>
    %18 = arith.mulf %1, %5 : vector<32x128xf32>
    %cst_3 = arith.constant dense<0.000000e+00> : vector<128xf32>
    %19 = vector.multi_reduction <add>, %18, %cst_3 [0] : vector<32x128xf32> to vector<128xf32>
    %20 = vector.shape_cast %19 : vector<128xf32> to vector<1x128xf32>
    %21 = arith.mulf %1, %6 : vector<32x128xf32>
    %cst_4 = arith.constant dense<0.000000e+00> : vector<128xf32>
    %22 = vector.multi_reduction <add>, %21, %cst_4 [0] : vector<32x128xf32> to vector<128xf32>
    %23 = vector.shape_cast %22 : vector<128xf32> to vector<1x128xf32>
    %24 = arith.mulf %1, %7 : vector<32x128xf32>
    %cst_5 = arith.constant dense<0.000000e+00> : vector<128xf32>
    %25 = vector.multi_reduction <add>, %24, %cst_5 [0] : vector<32x128xf32> to vector<128xf32>
    %26 = vector.shape_cast %25 : vector<128xf32> to vector<1x128xf32>
    %27 = arith.mulf %1, %8 : vector<32x128xf32>
    %cst_6 = arith.constant dense<0.000000e+00> : vector<128xf32>
    %28 = vector.multi_reduction <add>, %27, %cst_6 [0] : vector<32x128xf32> to vector<128xf32>
    %29 = vector.shape_cast %28 : vector<128xf32> to vector<1x128xf32>
    %30 = arith.mulf %2, %3 : vector<32x128xf32>
    %cst_7 = arith.constant dense<0.000000e+00> : vector<128xf32>
    %31 = vector.multi_reduction <add>, %30, %cst_7 [0] : vector<32x128xf32> to vector<128xf32>
    %32 = vector.shape_cast %31 : vector<128xf32> to vector<1x128xf32>
    %33 = arith.mulf %2, %4 : vector<32x128xf32>
    %cst_8 = arith.constant dense<0.000000e+00> : vector<128xf32>
    %34 = vector.multi_reduction <add>, %33, %cst_8 [0] : vector<32x128xf32> to vector<128xf32>
    %35 = vector.shape_cast %34 : vector<128xf32> to vector<1x128xf32>
    %36 = arith.mulf %2, %5 : vector<32x128xf32>
    %cst_9 = arith.constant dense<0.000000e+00> : vector<128xf32>
    %37 = vector.multi_reduction <add>, %36, %cst_9 [0] : vector<32x128xf32> to vector<128xf32>
    %38 = vector.shape_cast %37 : vector<128xf32> to vector<1x128xf32>
    %39 = arith.mulf %2, %6 : vector<32x128xf32>
    %cst_10 = arith.constant dense<0.000000e+00> : vector<128xf32>
    %40 = vector.multi_reduction <add>, %39, %cst_10 [0] : vector<32x128xf32> to vector<128xf32>
    %41 = vector.shape_cast %40 : vector<128xf32> to vector<1x128xf32>
    %42 = arith.mulf %2, %7 : vector<32x128xf32>
    %cst_11 = arith.constant dense<0.000000e+00> : vector<128xf32>
    %43 = vector.multi_reduction <add>, %42, %cst_11 [0] : vector<32x128xf32> to vector<128xf32>
    %44 = vector.shape_cast %43 : vector<128xf32> to vector<1x128xf32>
    %45 = arith.mulf %2, %8 : vector<32x128xf32>
    %cst_12 = arith.constant dense<0.000000e+00> : vector<128xf32>
    %46 = vector.multi_reduction <add>, %45, %cst_12 [0] : vector<32x128xf32> to vector<128xf32>
    %47 = vector.shape_cast %46 : vector<128xf32> to vector<1x128xf32>
    %48 = arith.mulf %3, %4 : vector<32x128xf32>
    %cst_13 = arith.constant dense<0.000000e+00> : vector<128xf32>
    %49 = vector.multi_reduction <add>, %48, %cst_13 [0] : vector<32x128xf32> to vector<128xf32>
    %50 = vector.shape_cast %49 : vector<128xf32> to vector<1x128xf32>
    %51 = arith.mulf %3, %5 : vector<32x128xf32>
    %cst_14 = arith.constant dense<0.000000e+00> : vector<128xf32>
    %52 = vector.multi_reduction <add>, %51, %cst_14 [0] : vector<32x128xf32> to vector<128xf32>
    %53 = vector.shape_cast %52 : vector<128xf32> to vector<1x128xf32>
    %54 = arith.mulf %3, %6 : vector<32x128xf32>
    %cst_15 = arith.constant dense<0.000000e+00> : vector<128xf32>
    %55 = vector.multi_reduction <add>, %54, %cst_15 [0] : vector<32x128xf32> to vector<128xf32>
    %56 = vector.shape_cast %55 : vector<128xf32> to vector<1x128xf32>
    %57 = arith.mulf %3, %7 : vector<32x128xf32>
    %cst_16 = arith.constant dense<0.000000e+00> : vector<128xf32>
    %58 = vector.multi_reduction <add>, %57, %cst_16 [0] : vector<32x128xf32> to vector<128xf32>
    %59 = vector.shape_cast %58 : vector<128xf32> to vector<1x128xf32>
    %60 = arith.mulf %3, %8 : vector<32x128xf32>
    %cst_17 = arith.constant dense<0.000000e+00> : vector<128xf32>
    %61 = vector.multi_reduction <add>, %60, %cst_17 [0] : vector<32x128xf32> to vector<128xf32>
    %62 = vector.shape_cast %61 : vector<128xf32> to vector<1x128xf32>
    %63 = arith.mulf %4, %5 : vector<32x128xf32>
    %cst_18 = arith.constant dense<0.000000e+00> : vector<128xf32>
    %64 = vector.multi_reduction <add>, %63, %cst_18 [0] : vector<32x128xf32> to vector<128xf32>
    %65 = vector.shape_cast %64 : vector<128xf32> to vector<1x128xf32>
    %66 = arith.mulf %4, %6 : vector<32x128xf32>
    %cst_19 = arith.constant dense<0.000000e+00> : vector<128xf32>
    %67 = vector.multi_reduction <add>, %66, %cst_19 [0] : vector<32x128xf32> to vector<128xf32>
    %68 = vector.shape_cast %67 : vector<128xf32> to vector<1x128xf32>
    %69 = arith.mulf %4, %7 : vector<32x128xf32>
    %cst_20 = arith.constant dense<0.000000e+00> : vector<128xf32>
    %70 = vector.multi_reduction <add>, %69, %cst_20 [0] : vector<32x128xf32> to vector<128xf32>
    %71 = vector.shape_cast %70 : vector<128xf32> to vector<1x128xf32>
    %72 = arith.mulf %4, %8 : vector<32x128xf32>
    %cst_21 = arith.constant dense<0.000000e+00> : vector<128xf32>
    %73 = vector.multi_reduction <add>, %72, %cst_21 [0] : vector<32x128xf32> to vector<128xf32>
    %74 = vector.shape_cast %73 : vector<128xf32> to vector<1x128xf32>
    %75 = arith.mulf %5, %6 : vector<32x128xf32>
    %cst_22 = arith.constant dense<0.000000e+00> : vector<128xf32>
    %76 = vector.multi_reduction <add>, %75, %cst_22 [0] : vector<32x128xf32> to vector<128xf32>
    %77 = vector.shape_cast %76 : vector<128xf32> to vector<1x128xf32>
    %78 = arith.mulf %5, %7 : vector<32x128xf32>
    %cst_23 = arith.constant dense<0.000000e+00> : vector<128xf32>
    %79 = vector.multi_reduction <add>, %78, %cst_23 [0] : vector<32x128xf32> to vector<128xf32>
    %80 = vector.shape_cast %79 : vector<128xf32> to vector<1x128xf32>
    %81 = arith.mulf %5, %8 : vector<32x128xf32>
    %cst_24 = arith.constant dense<0.000000e+00> : vector<128xf32>
    %82 = vector.multi_reduction <add>, %81, %cst_24 [0] : vector<32x128xf32> to vector<128xf32>
    %83 = vector.shape_cast %82 : vector<128xf32> to vector<1x128xf32>
    %84 = arith.mulf %6, %7 : vector<32x128xf32>
    %cst_25 = arith.constant dense<0.000000e+00> : vector<128xf32>
    %85 = vector.multi_reduction <add>, %84, %cst_25 [0] : vector<32x128xf32> to vector<128xf32>
    %86 = vector.shape_cast %85 : vector<128xf32> to vector<1x128xf32>
    %87 = arith.mulf %6, %8 : vector<32x128xf32>
    %cst_26 = arith.constant dense<0.000000e+00> : vector<128xf32>
    %88 = vector.multi_reduction <add>, %87, %cst_26 [0] : vector<32x128xf32> to vector<128xf32>
    %89 = vector.shape_cast %88 : vector<128xf32> to vector<1x128xf32>
    %90 = arith.mulf %7, %8 : vector<32x128xf32>
    %cst_27 = arith.constant dense<0.000000e+00> : vector<128xf32>
    %91 = vector.multi_reduction <add>, %90, %cst_27 [0] : vector<32x128xf32> to vector<128xf32>
    %92 = vector.shape_cast %91 : vector<128xf32> to vector<1x128xf32>
    %93 = tpu.concatenate %11, %14, %17, %20, %23, %26, %29, %32, %35, %38, %41, %44, %47, %50, %53, %56 in 0 : vector<1x128xf32>, vector<1x128xf32>, vector<1x128xf32>, vector<1x128xf32>, vector<1x128xf32>, vector<1x128xf32>, vector<1x128xf32>, vector<1x128xf32>, vector<1x128xf32>, vector<1x128xf32>, vector<1x128xf32>, vector<1x128xf32>, vector<1x128xf32>, vector<1x128xf32>, vector<1x128xf32>, vector<1x128xf32> -> vector<16x128xf32>
    %94 = tpu.concatenate %59, %62, %65, %68, %71, %74, %77, %80, %83, %86, %89, %92 in 0 : vector<1x128xf32>, vector<1x128xf32>, vector<1x128xf32>, vector<1x128xf32>, vector<1x128xf32>, vector<1x128xf32>, vector<1x128xf32>, vector<1x128xf32>, vector<1x128xf32>, vector<1x128xf32>, vector<1x128xf32>, vector<1x128xf32> -> vector<12x128xf32>
    %95 = tpu.concatenate %93, %94 in 0 : vector<16x128xf32>, vector<12x128xf32> -> vector<28x128xf32>
    %c0_28 = arith.constant 0 : index
    %c0_29 = arith.constant 0 : index
    %96 = vector.load %arg2[%c0_28, %c0_29] : memref<28x128xf32, #tpu.memory_space<vmem>>, vector<28x128xf32>
    tpu.vector_store %arg2[%c0_28, %c0_29], %95 {strides = array<i32>} : memref<28x128xf32, #tpu.memory_space<vmem>>, vector<28x128xf32>,
    return
  }
  func.func @transform_0(%arg0: i32) -> (i32, i32) {
    %c0_i32 = arith.constant 0 : i32
    %c0_i32_0 = arith.constant 0 : i32
    return %c0_i32, %arg0 : i32, i32
  }
  func.func @transform_1(%arg0: i32) -> (i32, i32) {
    %c0_i32 = arith.constant 0 : i32
    %c0_i32_0 = arith.constant 0 : i32
    return %c0_i32, %arg0 : i32, i32
  }
}

</mosaic_0001>

<llo_original>
// kernel: tpu_custom_call.1
$region0: #{tpu_custom_call.1}
  #allocation0 [shape = 'u32[]', space=smem, size = 0x4, offset = 0x4, fixed_abs, tag = 'smem constant byte address 0x4 - core index']
  #allocation1 [shape = 'u32[144,128]{1,0:T(1,128)}', space=vmem, size = 0x12000, scoped, tag = 'internal scratch']
  %s0 = inlined_call_operand.hbm [shape: f32[128,256], index: 0, kind: input, shape index: {}]
  %s1 = inlined_call_operand.vmem [shape: f32[128,28], index: 1, kind: output, shape index: {}]
  %s2 = sld [smem:[#allocation0]]
  $region18: #{tpu_custom_call.1} parent=0
    _
  %s4 = ssub.s32 1, %s2
  %s5 = scalar_select 0, %s4, %s2
  $region1: #{tpu_custom_call.1} parent=0
    #allocation2 [shape = 'u8[131072]{0}', space=vmem, size = 0x20000, scoped, tag = 'input window, operand 0, single buffered']
    #allocation3 [shape = 's32[1]{0}', space=sflag, size = 0x4, scoped, tag = 'scoped memory for tpu_custom_call.1']
    %6 = vsyncpa [#allocation3], 0
    // Predicated region
    $region2: #{tpu_custom_call.1} parent=1 // pred_check
      _
    $region3: #{tpu_custom_call.1} parent=1 // pred_check_branch
      %8 = sbr.rel (0) target = $region5
    $region4: #{tpu_custom_call.1} parent=1 // pred_region
      %s10 = ssub.s32 4096, 4096
      %11 = vsyncadd [#allocation3], %s10
      %s12 = sshll.u32 [#allocation2], 4
      %s13 = int_to_ptr.vmem [resolvable:$true] %s12
      %18 = dma.hbm_to_vmem [thread:$0]  %s0, 4096, %s13, [#allocation3], 256, 256, 16
    $region5: #{tpu_custom_call.1} parent=1 // pred_fallthru
      _
    // Predicated region
    $region6: #{tpu_custom_call.1} parent=1 // pred_check
      _
    $region7: #{tpu_custom_call.1} parent=1 // pred_check_branch
      %20 = sbr.rel (0) target = $region9
    $region8: #{tpu_custom_call.1} parent=1 // pred_region
      %21 = dma.done [#allocation3], 4096
    $region9: #{tpu_custom_call.1} parent=1 // pred_fallthru
      _
    %v22 = vld [vmem:[#allocation2] sm:$0xff]
    %v23 = vld [vmem:[#allocation2 + $0x8] sm:$0xff]
    %v24 = vld [vmem:[#allocation2 + $0x10] sm:$0xff]
    %v25 = vld [vmem:[#allocation2 + $0x18] sm:$0xff]
    %v26 = vld [vmem:[#allocation2 + $0x20] sm:$0xff]
    %v27 = vld [vmem:[#allocation2 + $0x28] sm:$0xff]
    %v28 = vld [vmem:[#allocation2 + $0x30] sm:$0xff]
    %v29 = vld [vmem:[#allocation2 + $0x38] sm:$0xff]
    %v30 = vld [vmem:[#allocation2 + $0x40] sm:$0xff]
    %v31 = vld [vmem:[#allocation2 + $0x48] sm:$0xff]
    %v32 = vld [vmem:[#allocation2 + $0x50] sm:$0xff]
    %v33 = vld [vmem:[#allocation2 + $0x58] sm:$0xff]
    %v34 = vld [vmem:[#allocation2 + $0x60] sm:$0xff]
    %v35 = vld [vmem:[#allocation2 + $0x68] sm:$0xff]
    %v36 = vld [vmem:[#allocation2 + $0x70] sm:$0xff]
    %v37 = vld [vmem:[#allocation2 + $0x78] sm:$0xff]
    %v38 = vld [vmem:[#allocation2 + $0x80] sm:$0xff]
    %v39 = vld [vmem:[#allocation2 + $0x88] sm:$0xff]
    %v40 = vld [vmem:[#allocation2 + $0x90] sm:$0xff]
    %v41 = vld [vmem:[#allocation2 + $0x98] sm:$0xff]
    %v42 = vld [vmem:[#allocation2 + $0xa0] sm:$0xff]
    %v43 = vld [vmem:[#allocation2 + $0xa8] sm:$0xff]
    %v44 = vld [vmem:[#allocation2 + $0xb0] sm:$0xff]
    %v45 = vld [vmem:[#allocation2 + $0xb8] sm:$0xff]
    %v46 = vld [vmem:[#allocation2 + $0xc0] sm:$0xff]
    %v47 = vld [vmem:[#allocation2 + $0xc8] sm:$0xff]
    %v48 = vld [vmem:[#allocation2 + $0xd0] sm:$0xff]
    %v49 = vld [vmem:[#allocation2 + $0xd8] sm:$0xff]
    %v50 = vld [vmem:[#allocation2 + $0xe0] sm:$0xff]
    %v51 = vld [vmem:[#allocation2 + $0xe8] sm:$0xff]
    %v52 = vld [vmem:[#allocation2 + $0xf0] sm:$0xff]
    %v53 = vld [vmem:[#allocation2 + $0xf8] sm:$0xff]
    %54 = vxpose.xlu0.b32.start [1/16] %v22, 128
    %55 = vxpose.xlu0.b32.cont [2/16] %v24, 128
    %56 = vxpose.xlu0.b32.cont [3/16] %v26, 128
    %57 = vxpose.xlu0.b32.cont [4/16] %v28, 128
    %58 = vxpose.xlu0.b32.cont [5/16] %v30, 128
    %59 = vxpose.xlu0.b32.cont [6/16] %v32, 128
    %60 = vxpose.xlu0.b32.cont [7/16] %v34, 128
    %61 = vxpose.xlu0.b32.cont [8/16] %v36, 128
    %62 = vxpose.xlu0.b32.cont [9/16] %v38, 128
    %63 = vxpose.xlu0.b32.cont [10/16] %v40, 128
    %64 = vxpose.xlu0.b32.cont [11/16] %v42, 128
    %65 = vxpose.xlu0.b32.cont [12/16] %v44, 128
    %66 = vxpose.xlu0.b32.cont [13/16] %v46, 128
    %67 = vxpose.xlu0.b32.cont [14/16] %v48, 128
    %68 = vxpose.xlu0.b32.cont [15/16] %v50, 128
    %69 = vxpose.xlu0.b32.end [16/16] %v52, 128
    %v70 = vpop.trf.xlu0
    %v71 = vpop.trf.xlu0
    %v72 = vpop.trf.xlu0
    %v73 = vpop.trf.xlu0
    %v74 = vpop.trf.xlu0
    %v75 = vpop.trf.xlu0
    %v76 = vpop.trf.xlu0
    %v77 = vpop.trf.xlu0
    %v78 = vpop.trf.xlu0
    %v79 = vpop.trf.xlu0
    %v80 = vpop.trf.xlu0
    %v81 = vpop.trf.xlu0
    %v82 = vpop.trf.xlu0
    %v83 = vpop.trf.xlu0
    %v84 = vpop.trf.xlu0
    %v85 = vpop.trf.xlu0
    %86 = vxpose.xlu0.b32.start [1/16] %v23, 128
    %87 = vxpose.xlu0.b32.cont [2/16] %v25, 128
    %88 = vxpose.xlu0.b32.cont [3/16] %v27, 128
    %89 = vxpose.xlu0.b32.cont [4/16] %v29, 128
    %90 = vxpose.xlu0.b32.cont [5/16] %v31, 128
    %91 = vxpose.xlu0.b32.cont [6/16] %v33, 128
    %92 = vxpose.xlu0.b32.cont [7/16] %v35, 128
    %93 = vxpose.xlu0.b32.cont [8/16] %v37, 128
    %94 = vxpose.xlu0.b32.cont [9/16] %v39, 128
    %95 = vxpose.xlu0.b32.cont [10/16] %v41, 128
    %96 = vxpose.xlu0.b32.cont [11/16] %v43, 128
    %97 = vxpose.xlu0.b32.cont [12/16] %v45, 128
    %98 = vxpose.xlu0.b32.cont [13/16] %v47, 128
    %99 = vxpose.xlu0.b32.cont [14/16] %v49, 128
    %100 = vxpose.xlu0.b32.cont [15/16] %v51, 128
    %101 = vxpose.xlu0.b32.end [16/16] %v53, 128
    %v102 = vpop.trf.xlu0
    %v103 = vpop.trf.xlu0
    %v104 = vpop.trf.xlu0
    %v105 = vpop.trf.xlu0
    %v106 = vpop.trf.xlu0
    %v107 = vpop.trf.xlu0
    %v108 = vpop.trf.xlu0
    %v109 = vpop.trf.xlu0
    %v110 = vpop.trf.xlu0
    %v111 = vpop.trf.xlu0
    %v112 = vpop.trf.xlu0
    %v113 = vpop.trf.xlu0
    %v114 = vpop.trf.xlu0
    %v115 = vpop.trf.xlu0
    %v116 = vpop.trf.xlu0
    %v117 = vpop.trf.xlu0
    %v118 = vmul.f32 %v70, %v74
    %v119 = vmul.f32 %v71, %v75
    %v120 = vmul.f32 %v72, %v76
    %v121 = vmul.f32 %v73, %v77
    %v122 = vadd.f32 %v118, %v119
    %v123 = vadd.f32 %v122, %v120
    %v124 = vadd.f32 %v123, %v121
    %v125 = vrot.slane %v124, 4
    %v126 = vadd.f32 %v124, %v125
    %v127 = vrot.slane %v126, 2
    %v128 = vadd.f32 %v126, %v127
    %v129 = vrot.slane %v128, 1
    %v130 = vadd.f32 %v128, %v129
    %v131 = vmul.f32 %v70, %v78
    %v132 = vmul.f32 %v71, %v79
    %v133 = vmul.f32 %v72, %v80
    %v134 = vmul.f32 %v73, %v81
    %v135 = vadd.f32 %v131, %v132
    %v136 = vadd.f32 %v135, %v133
    %v137 = vadd.f32 %v136, %v134
    %v138 = vrot.slane %v137, 4
    %v139 = vadd.f32 %v137, %v138
    %v140 = vrot.slane %v139, 2
    %v141 = vadd.f32 %v139, %v140
    %v142 = vrot.slane %v141, 1
    %v143 = vadd.f32 %v141, %v142
    %v144 = vmul.f32 %v70, %v82
    %v145 = vmul.f32 %v71, %v83
    %v146 = vmul.f32 %v72, %v84
    %v147 = vmul.f32 %v73, %v85
    %v148 = vadd.f32 %v144, %v145
    %v149 = vadd.f32 %v148, %v146
    %v150 = vadd.f32 %v149, %v147
    %v151 = vrot.slane %v150, 4
    %v152 = vadd.f32 %v150, %v151
    %v153 = vrot.slane %v152, 2
    %v154 = vadd.f32 %v152, %v153
    %v155 = vrot.slane %v154, 1
    %v156 = vadd.f32 %v154, %v155
    %v157 = vmul.f32 %v70, %v102
    %v158 = vmul.f32 %v71, %v103
    %v159 = vmul.f32 %v72, %v104
    %v160 = vmul.f32 %v73, %v105
    %v161 = vadd.f32 %v157, %v158
    %v162 = vadd.f32 %v161, %v159
    %v163 = vadd.f32 %v162, %v160
    %v164 = vrot.slane %v163, 4
    %v165 = vadd.f32 %v163, %v164
    %v166 = vrot.slane %v165, 2
    %v167 = vadd.f32 %v165, %v166
    %v168 = vrot.slane %v167, 1
    %v169 = vadd.f32 %v167, %v168
    %v170 = vmul.f32 %v70, %v106
    %v171 = vmul.f32 %v71, %v107
    %v172 = vmul.f32 %v72, %v108
    %v173 = vmul.f32 %v73, %v109
    %v174 = vadd.f32 %v170, %v171
    %v175 = vadd.f32 %v174, %v172
    %v176 = vadd.f32 %v175, %v173
    %v177 = vrot.slane %v176, 4
    %v178 = vadd.f32 %v176, %v177
    %v179 = vrot.slane %v178, 2
    %v180 = vadd.f32 %v178, %v179
    %v181 = vrot.slane %v180, 1
    %v182 = vadd.f32 %v180, %v181
    %v183 = vmul.f32 %v70, %v110
    %v184 = vmul.f32 %v71, %v111
    %v185 = vmul.f32 %v72, %v112
    %v186 = vmul.f32 %v73, %v113
    %v187 = vadd.f32 %v183, %v184
    %v188 = vadd.f32 %v187, %v185
    %v189 = vadd.f32 %v188, %v186
    %v190 = vrot.slane %v189, 4
    %v191 = vadd.f32 %v189, %v190
    %v192 = vrot.slane %v191, 2
    %v193 = vadd.f32 %v191, %v192
    %v194 = vrot.slane %v193, 1
    %v195 = vadd.f32 %v193, %v194
    %v196 = vmul.f32 %v70, %v114
    %v197 = vmul.f32 %v71, %v115
    %v198 = vmul.f32 %v72, %v116
    %v199 = vmul.f32 %v73, %v117
    %v200 = vadd.f32 %v196, %v197
    %v201 = vadd.f32 %v200, %v198
    %v202 = vadd.f32 %v201, %v199
    %v203 = vrot.slane %v202, 4
    %v204 = vadd.f32 %v202, %v203
    %v205 = vrot.slane %v204, 2
    %v206 = vadd.f32 %v204, %v205
    %v207 = vrot.slane %v206, 1
    %v208 = vadd.f32 %v206, %v207
    %v209 = vmul.f32 %v74, %v78
    %v210 = vmul.f32 %v75, %v79
    %v211 = vmul.f32 %v76, %v80
    %v212 = vmul.f32 %v77, %v81
    %v213 = vadd.f32 %v209, %v210
    %v214 = vadd.f32 %v213, %v211
    %v215 = vadd.f32 %v214, %v212
    %v216 = vrot.slane %v215, 4
    %v217 = vadd.f32 %v215, %v216
    %v218 = vrot.slane %v217, 2
    %v219 = vadd.f32 %v217, %v218
    %v220 = vrot.slane %v219, 1
    %v221 = vadd.f32 %v219, %v220
    %v222 = vmul.f32 %v74, %v82
    %v223 = vmul.f32 %v75, %v83
    %v224 = vmul.f32 %v76, %v84
    %v225 = vmul.f32 %v77, %v85
    %v226 = vadd.f32 %v222, %v223
    %v227 = vadd.f32 %v226, %v224
    %v228 = vadd.f32 %v227, %v225
    %v229 = vrot.slane %v228, 4
    %v230 = vadd.f32 %v228, %v229
    %v231 = vrot.slane %v230, 2
    %v232 = vadd.f32 %v230, %v231
    %v233 = vrot.slane %v232, 1
    %v234 = vadd.f32 %v232, %v233
    %v235 = vmul.f32 %v74, %v102
    %v236 = vmul.f32 %v75, %v103
    %v237 = vmul.f32 %v76, %v104
    %v238 = vmul.f32 %v77, %v105
    %v239 = vadd.f32 %v235, %v236
    %v240 = vadd.f32 %v239, %v237
    %v241 = vadd.f32 %v240, %v238
    %v242 = vrot.slane %v241, 4
    %v243 = vadd.f32 %v241, %v242
    %v244 = vrot.slane %v243, 2
    %v245 = vadd.f32 %v243, %v244
    %v246 = vrot.slane %v245, 1
    %v247 = vadd.f32 %v245, %v246
    %v248 = vmul.f32 %v74, %v106
    %v249 = vmul.f32 %v75, %v107
    %v250 = vmul.f32 %v76, %v108
    %v251 = vmul.f32 %v77, %v109
    %v252 = vadd.f32 %v248, %v249
    %v253 = vadd.f32 %v252, %v250
    %v254 = vadd.f32 %v253, %v251
    %v255 = vrot.slane %v254, 4
    %v256 = vadd.f32 %v254, %v255
    %v257 = vrot.slane %v256, 2
    %v258 = vadd.f32 %v256, %v257
    %v259 = vrot.slane %v258, 1
    %v260 = vadd.f32 %v258, %v259
    %v261 = vmul.f32 %v74, %v110
    %v262 = vmul.f32 %v75, %v111
    %v263 = vmul.f32 %v76, %v112
    %v264 = vmul.f32 %v77, %v113
    %v265 = vadd.f32 %v261, %v262
    %v266 = vadd.f32 %v265, %v263
    %v267 = vadd.f32 %v266, %v264
    %v268 = vrot.slane %v267, 4
    %v269 = vadd.f32 %v267, %v268
    %v270 = vrot.slane %v269, 2
    %v271 = vadd.f32 %v269, %v270
    %v272 = vrot.slane %v271, 1
    %v273 = vadd.f32 %v271, %v272
    %v274 = vmul.f32 %v74, %v114
    %v275 = vmul.f32 %v75, %v115
    %v276 = vmul.f32 %v76, %v116
    %v277 = vmul.f32 %v77, %v117
    %v278 = vadd.f32 %v274, %v275
    %v279 = vadd.f32 %v278, %v276
    %v280 = vadd.f32 %v279, %v277
    %v281 = vrot.slane %v280, 4
    %v282 = vadd.f32 %v280, %v281
    %v283 = vrot.slane %v282, 2
    %v284 = vadd.f32 %v282, %v283
    %v285 = vrot.slane %v284, 1
    %v286 = vadd.f32 %v284, %v285
    %v287 = vmul.f32 %v78, %v82
    %v288 = vmul.f32 %v79, %v83
    %v289 = vmul.f32 %v80, %v84
    %v290 = vmul.f32 %v81, %v85
    %v291 = vadd.f32 %v287, %v288
    %v292 = vadd.f32 %v291, %v289
    %v293 = vadd.f32 %v292, %v290
    %v294 = vrot.slane %v293, 4
    %v295 = vadd.f32 %v293, %v294
    %v296 = vrot.slane %v295, 2
    %v297 = vadd.f32 %v295, %v296
    %v298 = vrot.slane %v297, 1
    %v299 = vadd.f32 %v297, %v298
    %v300 = vmul.f32 %v78, %v102
    %v301 = vmul.f32 %v79, %v103
    %v302 = vmul.f32 %v80, %v104
    %v303 = vmul.f32 %v81, %v105
    %v304 = vadd.f32 %v300, %v301
    %v305 = vadd.f32 %v304, %v302
    %v306 = vadd.f32 %v305, %v303
    %v307 = vrot.slane %v306, 4
    %v308 = vadd.f32 %v306, %v307
    %v309 = vrot.slane %v308, 2
    %v310 = vadd.f32 %v308, %v309
    %v311 = vrot.slane %v310, 1
    %v312 = vadd.f32 %v310, %v311
    %v313 = vmul.f32 %v78, %v106
    %v314 = vmul.f32 %v79, %v107
    %v315 = vmul.f32 %v80, %v108
    %v316 = vmul.f32 %v81, %v109
    %v317 = vadd.f32 %v313, %v314
    %v318 = vadd.f32 %v317, %v315
    %v319 = vadd.f32 %v318, %v316
    %v320 = vrot.slane %v319, 4
    %v321 = vadd.f32 %v319, %v320
    %v322 = vrot.slane %v321, 2
    %v323 = vadd.f32 %v321, %v322
    %v324 = vrot.slane %v323, 1
    %v325 = vadd.f32 %v323, %v324
    %v326 = vmul.f32 %v78, %v110
    %v327 = vmul.f32 %v79, %v111
    %v328 = vmul.f32 %v80, %v112
    %v329 = vmul.f32 %v81, %v113
    %v330 = vadd.f32 %v326, %v327
    %v331 = vadd.f32 %v330, %v328
    %v332 = vadd.f32 %v331, %v329
    %v333 = vrot.slane %v332, 4
    %v334 = vadd.f32 %v332, %v333
    %v335 = vrot.slane %v334, 2
    %v336 = vadd.f32 %v334, %v335
    %v337 = vrot.slane %v336, 1
    %v338 = vadd.f32 %v336, %v337
    %v339 = vmul.f32 %v78, %v114
    %v340 = vmul.f32 %v79, %v115
    %v341 = vmul.f32 %v80, %v116
    %v342 = vmul.f32 %v81, %v117
    %v343 = vadd.f32 %v339, %v340
    %v344 = vadd.f32 %v343, %v341
    %v345 = vadd.f32 %v344, %v342
    %v346 = vrot.slane %v345, 4
    %v347 = vadd.f32 %v345, %v346
    %v348 = vrot.slane %v347, 2
    %v349 = vadd.f32 %v347, %v348
    %v350 = vrot.slane %v349, 1
    %v351 = vadd.f32 %v349, %v350
    %v352 = vmul.f32 %v82, %v102
    %v353 = vmul.f32 %v83, %v103
    %v354 = vmul.f32 %v84, %v104
    %v355 = vmul.f32 %v85, %v105
    %v356 = vadd.f32 %v352, %v353
    %v357 = vadd.f32 %v356, %v354
    %v358 = vadd.f32 %v357, %v355
    %v359 = vrot.slane %v358, 4
    %v360 = vadd.f32 %v358, %v359
    %v361 = vrot.slane %v360, 2
    %v362 = vadd.f32 %v360, %v361
    %v363 = vrot.slane %v362, 1
    %v364 = vadd.f32 %v362, %v363
    %v365 = vmul.f32 %v82, %v106
    %v366 = vmul.f32 %v83, %v107
    %v367 = vmul.f32 %v84, %v108
    %v368 = vmul.f32 %v85, %v109
    %v369 = vadd.f32 %v365, %v366
    %v370 = vadd.f32 %v369, %v367
    %v371 = vadd.f32 %v370, %v368
    %v372 = vrot.slane %v371, 4
    %v373 = vadd.f32 %v371, %v372
    %v374 = vrot.slane %v373, 2
    %v375 = vadd.f32 %v373, %v374
    %v376 = vrot.slane %v375, 1
    %v377 = vadd.f32 %v375, %v376
    %v378 = vmul.f32 %v82, %v110
    %v379 = vmul.f32 %v83, %v111
    %v380 = vmul.f32 %v84, %v112
    %v381 = vmul.f32 %v85, %v113
    %v382 = vadd.f32 %v378, %v379
    %v383 = vadd.f32 %v382, %v380
    %v384 = vadd.f32 %v383, %v381
    %v385 = vrot.slane %v384, 4
    %v386 = vadd.f32 %v384, %v385
    %v387 = vrot.slane %v386, 2
    %v388 = vadd.f32 %v386, %v387
    %v389 = vrot.slane %v388, 1
    %v390 = vadd.f32 %v388, %v389
    %v391 = vmul.f32 %v82, %v114
    %v392 = vmul.f32 %v83, %v115
    %v393 = vmul.f32 %v84, %v116
    %v394 = vmul.f32 %v85, %v117
    %v395 = vadd.f32 %v391, %v392
    %v396 = vadd.f32 %v395, %v393
    %v397 = vadd.f32 %v396, %v394
    %v398 = vrot.slane %v397, 4
    %v399 = vadd.f32 %v397, %v398
    %v400 = vrot.slane %v399, 2
    %v401 = vadd.f32 %v399, %v400
    %v402 = vrot.slane %v401, 1
    %v403 = vadd.f32 %v401, %v402
    %v404 = vmul.f32 %v102, %v106
    %v405 = vmul.f32 %v103, %v107
    %v406 = vmul.f32 %v104, %v108
    %v407 = vmul.f32 %v105, %v109
    %v408 = vadd.f32 %v404, %v405
    %v409 = vadd.f32 %v408, %v406
    %v410 = vadd.f32 %v409, %v407
    %v411 = vrot.slane %v410, 4
    %v412 = vadd.f32 %v410, %v411
    %v413 = vrot.slane %v412, 2
    %v414 = vadd.f32 %v412, %v413
    %v415 = vrot.slane %v414, 1
    %v416 = vadd.f32 %v414, %v415
    %v417 = vmul.f32 %v102, %v110
    %v418 = vmul.f32 %v103, %v111
    %v419 = vmul.f32 %v104, %v112
    %v420 = vmul.f32 %v105, %v113
    %v421 = vadd.f32 %v417, %v418
    %v422 = vadd.f32 %v421, %v419
    %v423 = vadd.f32 %v422, %v420
    %v424 = vrot.slane %v423, 4
    %v425 = vadd.f32 %v423, %v424
    %v426 = vrot.slane %v425, 2
    %v427 = vadd.f32 %v425, %v426
    %v428 = vrot.slane %v427, 1
    %v429 = vadd.f32 %v427, %v428
    %v430 = vmul.f32 %v102, %v114
    %v431 = vmul.f32 %v103, %v115
    %v432 = vmul.f32 %v104, %v116
    %v433 = vmul.f32 %v105, %v117
    %v434 = vadd.f32 %v430, %v431
    %v435 = vadd.f32 %v434, %v432
    %v436 = vadd.f32 %v435, %v433
    %v437 = vrot.slane %v436, 4
    %v438 = vadd.f32 %v436, %v437
    %v439 = vrot.slane %v438, 2
    %v440 = vadd.f32 %v438, %v439
    %v441 = vrot.slane %v440, 1
    %v442 = vadd.f32 %v440, %v441
    %v443 = vmul.f32 %v106, %v110
    %v444 = vmul.f32 %v107, %v111
    %v445 = vmul.f32 %v108, %v112
    %v446 = vmul.f32 %v109, %v113
    %v447 = vadd.f32 %v443, %v444
    %v448 = vadd.f32 %v447, %v445
    %v449 = vadd.f32 %v448, %v446
    %v450 = vrot.slane %v449, 4
    %v451 = vadd.f32 %v449, %v450
    %v452 = vrot.slane %v451, 2
    %v453 = vadd.f32 %v451, %v452
    %v454 = vrot.slane %v453, 1
    %v455 = vadd.f32 %v453, %v454
    %v456 = vmul.f32 %v106, %v114
    %v457 = vmul.f32 %v107, %v115
    %v458 = vmul.f32 %v108, %v116
    %v459 = vmul.f32 %v109, %v117
    %v460 = vadd.f32 %v456, %v457
    %v461 = vadd.f32 %v460, %v458
    %v462 = vadd.f32 %v461, %v459
    %v463 = vrot.slane %v462, 4
    %v464 = vadd.f32 %v462, %v463
    %v465 = vrot.slane %v464, 2
    %v466 = vadd.f32 %v464, %v465
    %v467 = vrot.slane %v466, 1
    %v468 = vadd.f32 %v466, %v467
    %v469 = vmul.f32 %v110, %v114
    %v470 = vmul.f32 %v111, %v115
    %v471 = vmul.f32 %v112, %v116
    %v472 = vmul.f32 %v113, %v117
    %v473 = vadd.f32 %v469, %v470
    %v474 = vadd.f32 %v473, %v471
    %v475 = vadd.f32 %v474, %v472
    %v476 = vrot.slane %v475, 4
    %v477 = vadd.f32 %v475, %v476
    %v478 = vrot.slane %v477, 2
    %v479 = vadd.f32 %v477, %v478
    %v480 = vrot.slane %v479, 1
    %v481 = vadd.f32 %v479, %v480
    %vm482 = vcmask 1040384
    %v483 = vsel %vm482, %v130, %v143
    %vm484 = vcmask 1041408
    %v485 = vsel %vm484, %v483, %v156
    %vm486 = vcmask 1042432
    %v487 = vsel %vm486, %v485, %v169
    %vm488 = vcmask 1043456
    %v489 = vsel %vm488, %v487, %v182
    %vm490 = vcmask 1044480
    %v491 = vsel %vm490, %v489, %v195
    %vm492 = vcmask 1045504
    %v493 = vsel %vm492, %v491, %v208
    %vm494 = vcmask 1046528
    %v495 = vsel %vm494, %v493, %v221
    %v496 = vsel %vm482, %v234, %v247
    %v497 = vsel %vm484, %v496, %v260
    %v498 = vsel %vm486, %v497, %v273
    %v499 = vsel %vm488, %v498, %v286
    %v500 = vsel %vm490, %v499, %v299
    %v501 = vsel %vm492, %v500, %v312
    %v502 = vsel %vm494, %v501, %v325
    %v503 = vsel %vm482, %v338, %v351
    %v504 = vsel %vm484, %v503, %v364
    %v505 = vsel %vm486, %v504, %v377
    %v506 = vsel %vm488, %v505, %v390
    %v507 = vsel %vm490, %v506, %v403
    %v508 = vsel %vm492, %v507, %v416
    %v509 = vsel %vm494, %v508, %v429
    %v510 = vsel %vm482, %v442, %v455
    %v511 = vsel %vm484, %v510, %v468
    %v512 = vsel %vm486, %v511, %v481
    %v513 = vsel %vm488, %v512, 0.0
    %514 = vxpose.xlu0.b32.start [1/16] %v495, 128
    %515 = vxpose.xlu0.b32.cont [2/16] %v502, 128
    %516 = vxpose.xlu0.b32.cont [3/16] %v509, 128
    %517 = vxpose.xlu0.b32.cont [4/16] %v513, 128
    %518 = vxpose.xlu0.b32.cont [5/16] 0.0, 128
    %519 = vxpose.xlu0.b32.cont [6/16] 0.0, 128
    %520 = vxpose.xlu0.b32.cont [7/16] 0.0, 128
    %521 = vxpose.xlu0.b32.cont [8/16] 0.0, 128
    %522 = vxpose.xlu0.b32.cont [9/16] 0.0, 128
    %523 = vxpose.xlu0.b32.cont [10/16] 0.0, 128
    %524 = vxpose.xlu0.b32.cont [11/16] 0.0, 128
    %525 = vxpose.xlu0.b32.cont [12/16] 0.0, 128
    %526 = vxpose.xlu0.b32.cont [13/16] 0.0, 128
    %527 = vxpose.xlu0.b32.cont [14/16] 0.0, 128
    %528 = vxpose.xlu0.b32.cont [15/16] 0.0, 128
    %529 = vxpose.xlu0.b32.end [16/16] 0.0, 128
    %v530 = vpop.trf.xlu0
    %v531 = vpop.trf.xlu0
    %v532 = vpop.trf.xlu0
    %v533 = vpop.trf.xlu0
    %v534 = vpop.trf.xlu0
    %v535 = vpop.trf.xlu0
    %v536 = vpop.trf.xlu0
    %v537 = vpop.trf.xlu0
    %v538 = vpop.trf.xlu0
    %v539 = vpop.trf.xlu0
    %v540 = vpop.trf.xlu0
    %v541 = vpop.trf.xlu0
    %v542 = vpop.trf.xlu0
    %v543 = vpop.trf.xlu0
    %v544 = vpop.trf.xlu0
    %v545 = vpop.trf.xlu0
    %vm546 = vcmask 228352
    %547 = vst.msk [vmem:[%s1] sm:$0xff] %vm546, %v530
    %548 = vst.msk [vmem:[%s1 + $0x8] sm:$0xff] %vm546, %v531
    %549 = vst.msk [vmem:[%s1 + $0x10] sm:$0xff] %vm546, %v532
    %550 = vst.msk [vmem:[%s1 + $0x18] sm:$0xff] %vm546, %v533
    %551 = vst.msk [vmem:[%s1 + $0x20] sm:$0xff] %vm546, %v534
    %552 = vst.msk [vmem:[%s1 + $0x28] sm:$0xff] %vm546, %v535
    %553 = vst.msk [vmem:[%s1 + $0x30] sm:$0xff] %vm546, %v536
    %554 = vst.msk [vmem:[%s1 + $0x38] sm:$0xff] %vm546, %v537
    %555 = vst.msk [vmem:[%s1 + $0x40] sm:$0xff] %vm546, %v538
    %556 = vst.msk [vmem:[%s1 + $0x48] sm:$0xff] %vm546, %v539
    %557 = vst.msk [vmem:[%s1 + $0x50] sm:$0xff] %vm546, %v540
    %558 = vst.msk [vmem:[%s1 + $0x58] sm:$0xff] %vm546, %v541
    %559 = vst.msk [vmem:[%s1 + $0x60] sm:$0xff] %vm546, %v542
    %560 = vst.msk [vmem:[%s1 + $0x68] sm:$0xff] %vm546, %v543
    %561 = vst.msk [vmem:[%s1 + $0x70] sm:$0xff] %vm546, %v544
    %562 = vst.msk [vmem:[%s1 + $0x78] sm:$0xff] %vm546, %v545
    // Predicated region
    $region10: #{tpu_custom_call.1} parent=1 // pred_check
      _
    $region11: #{tpu_custom_call.1} parent=1 // pred_check_branch
      %564 = sbr.rel (0) target = $region13
    $region12: #{tpu_custom_call.1} parent=1 // pred_region
      _
    $region13: #{tpu_custom_call.1} parent=1 // pred_fallthru
      _
    // Predicated region
    $region14: #{tpu_custom_call.1} parent=1 // pred_check
      _
    $region15: #{tpu_custom_call.1} parent=1 // pred_check_branch
      %566 = sbr.rel (0) target = $region17
    $region16: #{tpu_custom_call.1} parent=1 // pred_region
      _
    $region17: #{tpu_custom_call.1} parent=1 // pred_fallthru
      _
    %567 = vsyncpa [#allocation3], 1

// kernel: tpu_custom_call.1
$region0: #{tpu_custom_call.1}
  #allocation0 [shape = 'u32[]', space=smem, size = 0x4, offset = 0x4, fixed_abs, tag = 'smem constant byte address 0x4 - core index']
  #allocation1 [shape = 'u32[144,128]{1,0:T(1,128)}', space=vmem, size = 0x12000, scoped, tag = 'internal scratch']
  %s0 = inlined_call_operand.hbm [shape: f32[256,128], index: 0, kind: input, shape index: {}]
  %s1 = inlined_call_operand.hbm [shape: f32[28,128], index: 1, kind: output, shape index: {}]
  %s2 = sld [smem:[#allocation0]]
  $region18: #{tpu_custom_call.1} parent=0
    _
  %s4 = ssub.s32 1, %s2
  %s5 = scalar_select 0, %s4, %s2
  $region1: #{tpu_custom_call.1} parent=0
    #allocation2 [shape = 'u8[131072]{0}', space=vmem, size = 0x20000, scoped, tag = 'input window, operand 0, single buffered']
    #allocation3 [shape = 's32[1]{0}', space=sflag, size = 0x4, scoped, tag = 'scoped memory for tpu_custom_call.1']
    #allocation4 [shape = 's32[1]{0}', space=sflag, size = 0x4, scoped, tag = 'scoped memory for tpu_custom_call.1']
    #allocation5 [shape = 'u8[16384]{0}', space=vmem, size = 0x4000, scoped, tag = 'output window, operand 0, single buffered']
    %6 = vsyncpa [#allocation3], 0
    %7 = vsyncpa [#allocation4], 0
    // Predicated region
    $region2: #{tpu_custom_call.1} parent=1 // pred_check
      _
    $region3: #{tpu_custom_call.1} parent=1 // pred_check_branch
      %9 = sbr.rel (0) target = $region5
    $region4: #{tpu_custom_call.1} parent=1 // pred_region
      %s11 = ssub.s32 4096, 4096
      %12 = vsyncadd [#allocation3], %s11
      %s13 = sshll.u32 [#allocation2], 4
      %s14 = int_to_ptr.vmem [resolvable:$true] %s13
      %19 = dma.hbm_to_vmem [thread:$0]  %s0, 4096, %s14, [#allocation3], 128, 128, 8
    $region5: #{tpu_custom_call.1} parent=1 // pred_fallthru
      _
    // Predicated region
    $region6: #{tpu_custom_call.1} parent=1 // pred_check
      _
    $region7: #{tpu_custom_call.1} parent=1 // pred_check_branch
      %21 = sbr.rel (0) target = $region9
    $region8: #{tpu_custom_call.1} parent=1 // pred_region
      %22 = dma.done [#allocation3], 4096
    $region9: #{tpu_custom_call.1} parent=1 // pred_fallthru
      _
    %v23 = vld [vmem:[#allocation2] sm:$0xff]
    %v24 = vld [vmem:[#allocation2 + $0x8] sm:$0xff]
    %v25 = vld [vmem:[#allocation2 + $0x10] sm:$0xff]
    %v26 = vld [vmem:[#allocation2 + $0x18] sm:$0xff]
    %v27 = vld [vmem:[#allocation2 + $0x20] sm:$0xff]
    %v28 = vld [vmem:[#allocation2 + $0x28] sm:$0xff]
    %v29 = vld [vmem:[#allocation2 + $0x30] sm:$0xff]
    %v30 = vld [vmem:[#allocation2 + $0x38] sm:$0xff]
    %v31 = vld [vmem:[#allocation2 + $0x40] sm:$0xff]
    %v32 = vld [vmem:[#allocation2 + $0x48] sm:$0xff]
    %v33 = vld [vmem:[#allocation2 + $0x50] sm:$0xff]
    %v34 = vld [vmem:[#allocation2 + $0x58] sm:$0xff]
    %v35 = vld [vmem:[#allocation2 + $0x60] sm:$0xff]
    %v36 = vld [vmem:[#allocation2 + $0x68] sm:$0xff]
    %v37 = vld [vmem:[#allocation2 + $0x70] sm:$0xff]
    %v38 = vld [vmem:[#allocation2 + $0x78] sm:$0xff]
    %v39 = vld [vmem:[#allocation2 + $0x80] sm:$0xff]
    %v40 = vld [vmem:[#allocation2 + $0x88] sm:$0xff]
    %v41 = vld [vmem:[#allocation2 + $0x90] sm:$0xff]
    %v42 = vld [vmem:[#allocation2 + $0x98] sm:$0xff]
    %v43 = vld [vmem:[#allocation2 + $0xa0] sm:$0xff]
    %v44 = vld [vmem:[#allocation2 + $0xa8] sm:$0xff]
    %v45 = vld [vmem:[#allocation2 + $0xb0] sm:$0xff]
    %v46 = vld [vmem:[#allocation2 + $0xb8] sm:$0xff]
    %v47 = vld [vmem:[#allocation2 + $0xc0] sm:$0xff]
    %v48 = vld [vmem:[#allocation2 + $0xc8] sm:$0xff]
    %v49 = vld [vmem:[#allocation2 + $0xd0] sm:$0xff]
    %v50 = vld [vmem:[#allocation2 + $0xd8] sm:$0xff]
    %v51 = vld [vmem:[#allocation2 + $0xe0] sm:$0xff]
    %v52 = vld [vmem:[#allocation2 + $0xe8] sm:$0xff]
    %v53 = vld [vmem:[#allocation2 + $0xf0] sm:$0xff]
    %v54 = vld [vmem:[#allocation2 + $0xf8] sm:$0xff]
    %v55 = vmul.f32 %v23, %v27
    %v56 = vmul.f32 %v24, %v28
    %v57 = vmul.f32 %v25, %v29
    %v58 = vmul.f32 %v26, %v30
    %v59 = vadd.f32 %v55, %v56
    %v60 = vadd.f32 %v59, %v57
    %v61 = vadd.f32 %v60, %v58
    %v62 = vrot.slane %v61, 4
    %v63 = vadd.f32 %v61, %v62
    %v64 = vrot.slane %v63, 2
    %v65 = vadd.f32 %v63, %v64
    %v66 = vrot.slane %v65, 1
    %v67 = vadd.f32 %v65, %v66
    %v68 = vmul.f32 %v23, %v31
    %v69 = vmul.f32 %v24, %v32
    %v70 = vmul.f32 %v25, %v33
    %v71 = vmul.f32 %v26, %v34
    %v72 = vadd.f32 %v68, %v69
    %v73 = vadd.f32 %v72, %v70
    %v74 = vadd.f32 %v73, %v71
    %v75 = vrot.slane %v74, 4
    %v76 = vadd.f32 %v74, %v75
    %v77 = vrot.slane %v76, 2
    %v78 = vadd.f32 %v76, %v77
    %v79 = vrot.slane %v78, 1
    %v80 = vadd.f32 %v78, %v79
    %v81 = vmul.f32 %v23, %v35
    %v82 = vmul.f32 %v24, %v36
    %v83 = vmul.f32 %v25, %v37
    %v84 = vmul.f32 %v26, %v38
    %v85 = vadd.f32 %v81, %v82
    %v86 = vadd.f32 %v85, %v83
    %v87 = vadd.f32 %v86, %v84
    %v88 = vrot.slane %v87, 4
    %v89 = vadd.f32 %v87, %v88
    %v90 = vrot.slane %v89, 2
    %v91 = vadd.f32 %v89, %v90
    %v92 = vrot.slane %v91, 1
    %v93 = vadd.f32 %v91, %v92
    %v94 = vmul.f32 %v23, %v39
    %v95 = vmul.f32 %v24, %v40
    %v96 = vmul.f32 %v25, %v41
    %v97 = vmul.f32 %v26, %v42
    %v98 = vadd.f32 %v94, %v95
    %v99 = vadd.f32 %v98, %v96
    %v100 = vadd.f32 %v99, %v97
    %v101 = vrot.slane %v100, 4
    %v102 = vadd.f32 %v100, %v101
    %v103 = vrot.slane %v102, 2
    %v104 = vadd.f32 %v102, %v103
    %v105 = vrot.slane %v104, 1
    %v106 = vadd.f32 %v104, %v105
    %v107 = vmul.f32 %v23, %v43
    %v108 = vmul.f32 %v24, %v44
    %v109 = vmul.f32 %v25, %v45
    %v110 = vmul.f32 %v26, %v46
    %v111 = vadd.f32 %v107, %v108
    %v112 = vadd.f32 %v111, %v109
    %v113 = vadd.f32 %v112, %v110
    %v114 = vrot.slane %v113, 4
    %v115 = vadd.f32 %v113, %v114
    %v116 = vrot.slane %v115, 2
    %v117 = vadd.f32 %v115, %v116
    %v118 = vrot.slane %v117, 1
    %v119 = vadd.f32 %v117, %v118
    %v120 = vmul.f32 %v23, %v47
    %v121 = vmul.f32 %v24, %v48
    %v122 = vmul.f32 %v25, %v49
    %v123 = vmul.f32 %v26, %v50
    %v124 = vadd.f32 %v120, %v121
    %v125 = vadd.f32 %v124, %v122
    %v126 = vadd.f32 %v125, %v123
    %v127 = vrot.slane %v126, 4
    %v128 = vadd.f32 %v126, %v127
    %v129 = vrot.slane %v128, 2
    %v130 = vadd.f32 %v128, %v129
    %v131 = vrot.slane %v130, 1
    %v132 = vadd.f32 %v130, %v131
    %v133 = vmul.f32 %v23, %v51
    %v134 = vmul.f32 %v24, %v52
    %v135 = vmul.f32 %v25, %v53
    %v136 = vmul.f32 %v26, %v54
    %v137 = vadd.f32 %v133, %v134
    %v138 = vadd.f32 %v137, %v135
    %v139 = vadd.f32 %v138, %v136
    %v140 = vrot.slane %v139, 4
    %v141 = vadd.f32 %v139, %v140
    %v142 = vrot.slane %v141, 2
    %v143 = vadd.f32 %v141, %v142
    %v144 = vrot.slane %v143, 1
    %v145 = vadd.f32 %v143, %v144
    %v146 = vmul.f32 %v27, %v31
    %v147 = vmul.f32 %v28, %v32
    %v148 = vmul.f32 %v29, %v33
    %v149 = vmul.f32 %v30, %v34
    %v150 = vadd.f32 %v146, %v147
    %v151 = vadd.f32 %v150, %v148
    %v152 = vadd.f32 %v151, %v149
    %v153 = vrot.slane %v152, 4
    %v154 = vadd.f32 %v152, %v153
    %v155 = vrot.slane %v154, 2
    %v156 = vadd.f32 %v154, %v155
    %v157 = vrot.slane %v156, 1
    %v158 = vadd.f32 %v156, %v157
    %v159 = vmul.f32 %v27, %v35
    %v160 = vmul.f32 %v28, %v36
    %v161 = vmul.f32 %v29, %v37
    %v162 = vmul.f32 %v30, %v38
    %v163 = vadd.f32 %v159, %v160
    %v164 = vadd.f32 %v163, %v161
    %v165 = vadd.f32 %v164, %v162
    %v166 = vrot.slane %v165, 4
    %v167 = vadd.f32 %v165, %v166
    %v168 = vrot.slane %v167, 2
    %v169 = vadd.f32 %v167, %v168
    %v170 = vrot.slane %v169, 1
    %v171 = vadd.f32 %v169, %v170
    %v172 = vmul.f32 %v27, %v39
    %v173 = vmul.f32 %v28, %v40
    %v174 = vmul.f32 %v29, %v41
    %v175 = vmul.f32 %v30, %v42
    %v176 = vadd.f32 %v172, %v173
    %v177 = vadd.f32 %v176, %v174
    %v178 = vadd.f32 %v177, %v175
    %v179 = vrot.slane %v178, 4
    %v180 = vadd.f32 %v178, %v179
    %v181 = vrot.slane %v180, 2
    %v182 = vadd.f32 %v180, %v181
    %v183 = vrot.slane %v182, 1
    %v184 = vadd.f32 %v182, %v183
    %v185 = vmul.f32 %v27, %v43
    %v186 = vmul.f32 %v28, %v44
    %v187 = vmul.f32 %v29, %v45
    %v188 = vmul.f32 %v30, %v46
    %v189 = vadd.f32 %v185, %v186
    %v190 = vadd.f32 %v189, %v187
    %v191 = vadd.f32 %v190, %v188
    %v192 = vrot.slane %v191, 4
    %v193 = vadd.f32 %v191, %v192
    %v194 = vrot.slane %v193, 2
    %v195 = vadd.f32 %v193, %v194
    %v196 = vrot.slane %v195, 1
    %v197 = vadd.f32 %v195, %v196
    %v198 = vmul.f32 %v27, %v47
    %v199 = vmul.f32 %v28, %v48
    %v200 = vmul.f32 %v29, %v49
    %v201 = vmul.f32 %v30, %v50
    %v202 = vadd.f32 %v198, %v199
    %v203 = vadd.f32 %v202, %v200
    %v204 = vadd.f32 %v203, %v201
    %v205 = vrot.slane %v204, 4
    %v206 = vadd.f32 %v204, %v205
    %v207 = vrot.slane %v206, 2
    %v208 = vadd.f32 %v206, %v207
    %v209 = vrot.slane %v208, 1
    %v210 = vadd.f32 %v208, %v209
    %v211 = vmul.f32 %v27, %v51
    %v212 = vmul.f32 %v28, %v52
    %v213 = vmul.f32 %v29, %v53
    %v214 = vmul.f32 %v30, %v54
    %v215 = vadd.f32 %v211, %v212
    %v216 = vadd.f32 %v215, %v213
    %v217 = vadd.f32 %v216, %v214
    %v218 = vrot.slane %v217, 4
    %v219 = vadd.f32 %v217, %v218
    %v220 = vrot.slane %v219, 2
    %v221 = vadd.f32 %v219, %v220
    %v222 = vrot.slane %v221, 1
    %v223 = vadd.f32 %v221, %v222
    %v224 = vmul.f32 %v31, %v35
    %v225 = vmul.f32 %v32, %v36
    %v226 = vmul.f32 %v33, %v37
    %v227 = vmul.f32 %v34, %v38
    %v228 = vadd.f32 %v224, %v225
    %v229 = vadd.f32 %v228, %v226
    %v230 = vadd.f32 %v229, %v227
    %v231 = vrot.slane %v230, 4
    %v232 = vadd.f32 %v230, %v231
    %v233 = vrot.slane %v232, 2
    %v234 = vadd.f32 %v232, %v233
    %v235 = vrot.slane %v234, 1
    %v236 = vadd.f32 %v234, %v235
    %v237 = vmul.f32 %v31, %v39
    %v238 = vmul.f32 %v32, %v40
    %v239 = vmul.f32 %v33, %v41
    %v240 = vmul.f32 %v34, %v42
    %v241 = vadd.f32 %v237, %v238
    %v242 = vadd.f32 %v241, %v239
    %v243 = vadd.f32 %v242, %v240
    %v244 = vrot.slane %v243, 4
    %v245 = vadd.f32 %v243, %v244
    %v246 = vrot.slane %v245, 2
    %v247 = vadd.f32 %v245, %v246
    %v248 = vrot.slane %v247, 1
    %v249 = vadd.f32 %v247, %v248
    %v250 = vmul.f32 %v31, %v43
    %v251 = vmul.f32 %v32, %v44
    %v252 = vmul.f32 %v33, %v45
    %v253 = vmul.f32 %v34, %v46
    %v254 = vadd.f32 %v250, %v251
    %v255 = vadd.f32 %v254, %v252
    %v256 = vadd.f32 %v255, %v253
    %v257 = vrot.slane %v256, 4
    %v258 = vadd.f32 %v256, %v257
    %v259 = vrot.slane %v258, 2
    %v260 = vadd.f32 %v258, %v259
    %v261 = vrot.slane %v260, 1
    %v262 = vadd.f32 %v260, %v261
    %v263 = vmul.f32 %v31, %v47
    %v264 = vmul.f32 %v32, %v48
    %v265 = vmul.f32 %v33, %v49
    %v266 = vmul.f32 %v34, %v50
    %v267 = vadd.f32 %v263, %v264
    %v268 = vadd.f32 %v267, %v265
    %v269 = vadd.f32 %v268, %v266
    %v270 = vrot.slane %v269, 4
    %v271 = vadd.f32 %v269, %v270
    %v272 = vrot.slane %v271, 2
    %v273 = vadd.f32 %v271, %v272
    %v274 = vrot.slane %v273, 1
    %v275 = vadd.f32 %v273, %v274
    %v276 = vmul.f32 %v31, %v51
    %v277 = vmul.f32 %v32, %v52
    %v278 = vmul.f32 %v33, %v53
    %v279 = vmul.f32 %v34, %v54
    %v280 = vadd.f32 %v276, %v277
    %v281 = vadd.f32 %v280, %v278
    %v282 = vadd.f32 %v281, %v279
    %v283 = vrot.slane %v282, 4
    %v284 = vadd.f32 %v282, %v283
    %v285 = vrot.slane %v284, 2
    %v286 = vadd.f32 %v284, %v285
    %v287 = vrot.slane %v286, 1
    %v288 = vadd.f32 %v286, %v287
    %v289 = vmul.f32 %v35, %v39
    %v290 = vmul.f32 %v36, %v40
    %v291 = vmul.f32 %v37, %v41
    %v292 = vmul.f32 %v38, %v42
    %v293 = vadd.f32 %v289, %v290
    %v294 = vadd.f32 %v293, %v291
    %v295 = vadd.f32 %v294, %v292
    %v296 = vrot.slane %v295, 4
    %v297 = vadd.f32 %v295, %v296
    %v298 = vrot.slane %v297, 2
    %v299 = vadd.f32 %v297, %v298
    %v300 = vrot.slane %v299, 1
    %v301 = vadd.f32 %v299, %v300
    %v302 = vmul.f32 %v35, %v43
    %v303 = vmul.f32 %v36, %v44
    %v304 = vmul.f32 %v37, %v45
    %v305 = vmul.f32 %v38, %v46
    %v306 = vadd.f32 %v302, %v303
    %v307 = vadd.f32 %v306, %v304
    %v308 = vadd.f32 %v307, %v305
    %v309 = vrot.slane %v308, 4
    %v310 = vadd.f32 %v308, %v309
    %v311 = vrot.slane %v310, 2
    %v312 = vadd.f32 %v310, %v311
    %v313 = vrot.slane %v312, 1
    %v314 = vadd.f32 %v312, %v313
    %v315 = vmul.f32 %v35, %v47
    %v316 = vmul.f32 %v36, %v48
    %v317 = vmul.f32 %v37, %v49
    %v318 = vmul.f32 %v38, %v50
    %v319 = vadd.f32 %v315, %v316
    %v320 = vadd.f32 %v319, %v317
    %v321 = vadd.f32 %v320, %v318
    %v322 = vrot.slane %v321, 4
    %v323 = vadd.f32 %v321, %v322
    %v324 = vrot.slane %v323, 2
    %v325 = vadd.f32 %v323, %v324
    %v326 = vrot.slane %v325, 1
    %v327 = vadd.f32 %v325, %v326
    %v328 = vmul.f32 %v35, %v51
    %v329 = vmul.f32 %v36, %v52
    %v330 = vmul.f32 %v37, %v53
    %v331 = vmul.f32 %v38, %v54
    %v332 = vadd.f32 %v328, %v329
    %v333 = vadd.f32 %v332, %v330
    %v334 = vadd.f32 %v333, %v331
    %v335 = vrot.slane %v334, 4
    %v336 = vadd.f32 %v334, %v335
    %v337 = vrot.slane %v336, 2
    %v338 = vadd.f32 %v336, %v337
    %v339 = vrot.slane %v338, 1
    %v340 = vadd.f32 %v338, %v339
    %v341 = vmul.f32 %v39, %v43
    %v342 = vmul.f32 %v40, %v44
    %v343 = vmul.f32 %v41, %v45
    %v344 = vmul.f32 %v42, %v46
    %v345 = vadd.f32 %v341, %v342
    %v346 = vadd.f32 %v345, %v343
    %v347 = vadd.f32 %v346, %v344
    %v348 = vrot.slane %v347, 4
    %v349 = vadd.f32 %v347, %v348
    %v350 = vrot.slane %v349, 2
    %v351 = vadd.f32 %v349, %v350
    %v352 = vrot.slane %v351, 1
    %v353 = vadd.f32 %v351, %v352
    %v354 = vmul.f32 %v39, %v47
    %v355 = vmul.f32 %v40, %v48
    %v356 = vmul.f32 %v41, %v49
    %v357 = vmul.f32 %v42, %v50
    %v358 = vadd.f32 %v354, %v355
    %v359 = vadd.f32 %v358, %v356
    %v360 = vadd.f32 %v359, %v357
    %v361 = vrot.slane %v360, 4
    %v362 = vadd.f32 %v360, %v361
    %v363 = vrot.slane %v362, 2
    %v364 = vadd.f32 %v362, %v363
    %v365 = vrot.slane %v364, 1
    %v366 = vadd.f32 %v364, %v365
    %v367 = vmul.f32 %v39, %v51
    %v368 = vmul.f32 %v40, %v52
    %v369 = vmul.f32 %v41, %v53
    %v370 = vmul.f32 %v42, %v54
    %v371 = vadd.f32 %v367, %v368
    %v372 = vadd.f32 %v371, %v369
    %v373 = vadd.f32 %v372, %v370
    %v374 = vrot.slane %v373, 4
    %v375 = vadd.f32 %v373, %v374
    %v376 = vrot.slane %v375, 2
    %v377 = vadd.f32 %v375, %v376
    %v378 = vrot.slane %v377, 1
    %v379 = vadd.f32 %v377, %v378
    %v380 = vmul.f32 %v43, %v47
    %v381 = vmul.f32 %v44, %v48
    %v382 = vmul.f32 %v45, %v49
    %v383 = vmul.f32 %v46, %v50
    %v384 = vadd.f32 %v380, %v381
    %v385 = vadd.f32 %v384, %v382
    %v386 = vadd.f32 %v385, %v383
    %v387 = vrot.slane %v386, 4
    %v388 = vadd.f32 %v386, %v387
    %v389 = vrot.slane %v388, 2
    %v390 = vadd.f32 %v388, %v389
    %v391 = vrot.slane %v390, 1
    %v392 = vadd.f32 %v390, %v391
    %v393 = vmul.f32 %v43, %v51
    %v394 = vmul.f32 %v44, %v52
    %v395 = vmul.f32 %v45, %v53
    %v396 = vmul.f32 %v46, %v54
    %v397 = vadd.f32 %v393, %v394
    %v398 = vadd.f32 %v397, %v395
    %v399 = vadd.f32 %v398, %v396
    %v400 = vrot.slane %v399, 4
    %v401 = vadd.f32 %v399, %v400
    %v402 = vrot.slane %v401, 2
    %v403 = vadd.f32 %v401, %v402
    %v404 = vrot.slane %v403, 1
    %v405 = vadd.f32 %v403, %v404
    %v406 = vmul.f32 %v47, %v51
    %v407 = vmul.f32 %v48, %v52
    %v408 = vmul.f32 %v49, %v53
    %v409 = vmul.f32 %v50, %v54
    %v410 = vadd.f32 %v406, %v407
    %v411 = vadd.f32 %v410, %v408
    %v412 = vadd.f32 %v411, %v409
    %v413 = vrot.slane %v412, 4
    %v414 = vadd.f32 %v412, %v413
    %v415 = vrot.slane %v414, 2
    %v416 = vadd.f32 %v414, %v415
    %v417 = vrot.slane %v416, 1
    %v418 = vadd.f32 %v416, %v417
    %vm419 = vcmask 1040384
    %v420 = vsel %vm419, %v67, %v80
    %vm421 = vcmask 1041408
    %v422 = vsel %vm421, %v420, %v93
    %vm423 = vcmask 1042432
    %v424 = vsel %vm423, %v422, %v106
    %vm425 = vcmask 1043456
    %v426 = vsel %vm425, %v424, %v119
    %vm427 = vcmask 1044480
    %v428 = vsel %vm427, %v426, %v132
    %vm429 = vcmask 1045504
    %v430 = vsel %vm429, %v428, %v145
    %vm431 = vcmask 1046528
    %v432 = vsel %vm431, %v430, %v158
    %v433 = vsel %vm419, %v171, %v184
    %v434 = vsel %vm421, %v433, %v197
    %v435 = vsel %vm423, %v434, %v210
    %v436 = vsel %vm425, %v435, %v223
    %v437 = vsel %vm427, %v436, %v236
    %v438 = vsel %vm429, %v437, %v249
    %v439 = vsel %vm431, %v438, %v262
    %v440 = vsel %vm419, %v275, %v288
    %v441 = vsel %vm421, %v440, %v301
    %v442 = vsel %vm423, %v441, %v314
    %v443 = vsel %vm425, %v442, %v327
    %v444 = vsel %vm427, %v443, %v340
    %v445 = vsel %vm429, %v444, %v353
    %v446 = vsel %vm431, %v445, %v366
    %v447 = vsel %vm419, %v379, %v392
    %v448 = vsel %vm421, %v447, %v405
    %v449 = vsel %vm423, %v448, %v418
    %450 = vst [vmem:[#allocation5] sm:$0xff] %v432
    %451 = vst [vmem:[#allocation5 + $0x8] sm:$0xff] %v439
    %452 = vst [vmem:[#allocation5 + $0x10] sm:$0xff] %v446
    %453 = vst [vmem:[#allocation5 + $0x18] sm:$0xf] %v449
    // Predicated region
    $region10: #{tpu_custom_call.1} parent=1 // pred_check
      _
    $region11: #{tpu_custom_call.1} parent=1 // pred_check_branch
      %455 = sbr.rel (0) target = $region13
    $region12: #{tpu_custom_call.1} parent=1 // pred_region
      %s457 = ssub.s32 512, 512
      %458 = vsyncadd [#allocation4], %s457
      %s459 = sshll.u32 [#allocation5], 4
      %s460 = int_to_ptr.vmem [resolvable:$true] %s459
      %465 = dma.vmem_to_hbm [thread:$0]  %s460, 512, %s1, [#allocation4], 128, 128, 8
    $region13: #{tpu_custom_call.1} parent=1 // pred_fallthru
      _
    // Predicated region
    $region14: #{tpu_custom_call.1} parent=1 // pred_check
      _
    $region15: #{tpu_custom_call.1} parent=1 // pred_check_branch
      %467 = sbr.rel (0) target = $region17
    $region16: #{tpu_custom_call.1} parent=1 // pred_region
      %468 = dma.done [#allocation4], 512
    $region17: #{tpu_custom_call.1} parent=1 // pred_fallthru
      _
    %469 = vsyncpa [#allocation3], 1
    %470 = vsyncpa [#allocation4], 1

</llo_original>
